<compile_context>
chip_gen: v5e
topology: v5e:2x2
jax: 0.10.0
libtpu: 0.0.40
codegen_flags: <defaults>
</compile_context>

<pallas_src>
import functools

import jax
import jax.numpy as jnp
import numpy as np
from jax.experimental import pallas as pl
from jax.experimental.pallas import tpu as pltpu

SMOOTH = 1e-6
LANES = 128


def _make_dice_kernel(C, rows_per_tile, s_valid, needs_mask, last_tile):
    def kernel(preds_ref, targets_ref, out_ref):
        # preds_ref:   (B_TILE, C, R, 128)  float (f32 or bf16)
        # targets_ref: (B_TILE, R, 128)     int
        # out_ref:     (3, 128)             float32 lane-partials
        x1 = preds_ref[:, 1, :, :].astype(jnp.float32)          # (B, R, 128)

        # Channel-1-relative softmax: p1 = 1 / (1 + sum_{c!=1} exp(x_c - x1)).
        # One fewer exp per pixel and no channel max vs. the max-subtracted
        # form; denom >= 1 so the reciprocal is always well-defined.
        if C <= 32:
            denom = jnp.ones_like(x1)                           # c == 1 term
            for c in range(C):
                if c == 1:
                    continue
                xc = preds_ref[:, c, :, :].astype(jnp.float32)
                denom = denom + jnp.exp(xc - x1)
        else:
            x = preds_ref[...].astype(jnp.float32)              # (B, C, R, 128)
            denom = jnp.sum(jnp.exp(x - x1[:, None]), axis=1)   # c==1 term == 1
        p1 = pl.reciprocal(denom)                               # exact recip

        t = (targets_ref[...] == 1).astype(jnp.float32)         # (B, R, 128)

        def store(p, tt):
            # Sublane (+ batch) reductions only; the single cross-lane reduce
            # of the tiny (..., 3, 128) partials happens once, in plain JAX.
            out_ref[0, :] = jnp.sum(p * tt, axis=(0, 1))        # intersection
            out_ref[1, :] = jnp.sum(p, axis=(0, 1))             # sum(p)
            out_ref[2, :] = jnp.sum(tt, axis=(0, 1))            # sum(t)

        if needs_mask:
            # Only the last spatial tile may contain out-of-bounds / padded
            # pixels; pay the mask arithmetic only there.
            is_last = pl.program_id(1) == last_tile

            @pl.when(is_last)
            def _():
                r_ids = jax.lax.broadcasted_iota(
                    jnp.int32, (1, rows_per_tile, LANES), 1)
                l_ids = jax.lax.broadcasted_iota(
                    jnp.int32, (1, rows_per_tile, LANES), 2)
                flat = (last_tile * rows_per_tile + r_ids) * LANES + l_ids
                valid = flat < s_valid                          # (1, R, 128)
                # select (not multiply): OOB garbage may be inf/NaN.
                store(jnp.where(valid, p1, 0.0), jnp.where(valid, t, 0.0))

            @pl.when(jnp.logical_not(is_last))
            def _():
                store(p1, t)
        else:
            store(p1, t)

    return kernel


@functools.partial(jax.jit, static_argnames=("smooth", "max_rows_per_tile"))
def dice_loss(preds, targets, smooth=SMOOTH, max_rows_per_tile=None):
    """preds: (N, C, H, W) float (f32/bf16); targets: (N, H, W) int.

    Returns scalar float32 loss = 1 - dice (matches the PyTorch DiceLoss).
    `max_rows_per_tile` is a tuning/testing knob capping the spatial tile.
    """
    N, C, H, W = preds.shape
    assert C >= 2, "DiceLoss needs at least 2 channels (uses channel 1)"
    assert targets.shape == (N, H, W)

    S = H * W
    rows = pl.cdiv(S, LANES)
    S128 = rows * LANES

    # Free, transpose-less reshape into a lane-dense (rows, 128) layout.
    preds_r = preds.reshape(N, C, S)
    targets_r = targets.reshape(N, S)
    if S128 != S:
        # TODO(synk): only this rare (H*W % 128 != 0) path still pays a pad
        # copy of preds; the 128-aligned path below is completely copy-free.
        preds_r = jnp.pad(preds_r, ((0, 0), (0, 0), (0, S128 - S)))
        targets_r = jnp.pad(targets_r, ((0, 0), (0, S128 - S)))
    preds_r = preds_r.reshape(N, C, rows, LANES)
    targets_r = targets_r.reshape(N, rows, LANES)

    # ---- tile-size selection (C-, dtype- and generation-aware) -------------
    try:
        vmem_cap = int(getattr(pltpu.get_tpu_info(), "vmem_capacity_bytes",
                               64 << 20))
    except Exception:                      # conservative (v7x per-core) default
        vmem_cap = 64 << 20

    itemsize = preds.dtype.itemsize
    t_itemsize = targets.dtype.itemsize
    target_bytes = min(4 << 20, max(vmem_cap // 16, 1 << 20))  # per preds block

    cap_rows = (target_bytes // (C * LANES * itemsize)) // 8 * 8
    cap_rows = int(max(8, min(2048, cap_rows)))
    if max_rows_per_tile is not None:
        cap_rows = int(max(8, min(cap_rows, (max_rows_per_tile // 8) * 8)))

    if rows <= cap_rows:
        rows_per_tile = rows                        # full-extent block (legal)
    else:
        # Prefer an exact divisor (multiple of 8) so no tile runs out of
        # bounds; otherwise cover with a partially-OOB, masked last tile.
        rows_per_tile = 0
        for cand in range(cap_rows, max(8, cap_rows // 2) - 1, -8):
            if rows % cand == 0:
                rows_per_tile = cand
                break
        if rows_per_tile == 0:
            rows_per_tile = cap_rows
    num_tiles = pl.cdiv(rows, rows_per_tile)

    # Small images: pack several images per grid step so each step moves a
    # useful amount of data (but keep >= 2 grid steps when N >= 2 so both
    # v7x TensorCores get work).
    block_bytes = rows_per_tile * LANES * (C * itemsize + t_itemsize)
    b_tile = 1
    if num_tiles == 1 and N > 1:
        max_b = int(max(1, target_bytes // max(block_bytes, 1)))
        for d in range(min(N, max_b), 0, -1):
            if N % d == 0 and N // d >= 2:
                b_tile = d
                break

    # v7x has 2 TensorCores: make sure the parallel grid has >= 2 steps.
    if (N // b_tile) * num_tiles < 2 and rows >= 16:
        rows_per_tile = min(rows_per_tile, ((rows + 1) // 2 + 7) // 8 * 8)
        num_tiles = pl.cdiv(rows, rows_per_tile)

    covered = num_tiles * rows_per_tile * LANES
    needs_mask = covered != S
    NB = N // b_tile

    kernel = _make_dice_kernel(C, rows_per_tile, S, needs_mask, num_tiles - 1)

    # Double-buffered inputs + tiny partial outputs + compiler headroom,
    # capped at 75% of this generation's physical VMEM.
    in_bytes = b_tile * rows_per_tile * LANES * (C * itemsize + t_itemsize)
    vmem_limit = int(min(max(2 * in_bytes + (8 << 20), 16 << 20),
                         vmem_cap * 3 // 4))

    partials = pl.pallas_call(
        kernel,
        out_shape=jax.ShapeDtypeStruct((NB, num_tiles, 3, LANES), jnp.float32),
        grid_spec=pltpu.PrefetchScalarGridSpec(
            num_scalar_prefetch=0,
            grid=(NB, num_tiles),
            in_specs=[
                pl.BlockSpec((b_tile, C, rows_per_tile, LANES),
                             lambda b, s: (b, 0, s, 0)),
                pl.BlockSpec((b_tile, rows_per_tile, LANES),
                             lambda b, s: (b, s, 0)),
            ],
            # Each grid step owns its own partial-sum block -> no cross-step
            # dependency -> both axes "parallel" (v7x megacore friendly).
            out_specs=pl.BlockSpec((None, None, 3, LANES),
                                   lambda b, s: (b, s, 0, 0)),
        ),
        compiler_params=pltpu.CompilerParams(
            dimension_semantics=("parallel", "parallel"),
            vmem_limit_bytes=vmem_limit,
        ),
    )(preds_r, targets_r)

    # Tiny final reduce + dice in plain JAX.
    sums = jnp.sum(partials, axis=(0, 1, 3))               # (3,)
    intersection, sum_p, sum_t = sums[0], sums[1], sums[2]
    dice = (2.0 * intersection + smooth) / (sum_p + sum_t + smooth)
    return (1.0 - dice).astype(jnp.float32)


def dice_loss_ref(preds, targets, smooth=SMOOTH):
    p = jax.nn.softmax(preds.astype(jnp.float32), axis=1)[:, 1, :, :]
    t = (targets == 1).astype(jnp.float32)
    inter = jnp.sum(p * t)
    dice = (2.0 * inter + smooth) / (jnp.sum(p) + jnp.sum(t) + smooth)
    return 1.0 - dice


if __name__ == "__main__":
    key = jax.random.PRNGKey(0)
    k1, k2, k3, k4, k5, k6, k7, k8 = jax.random.split(key, 8)

    # Case 1: typical aligned shapes -> copy-free path, no masking.
    N, C, H, W = 2, 4, 16, 16
    preds = jax.random.normal(k1, (N, C, H, W), dtype=jnp.float32)
    targets = jax.random.randint(k2, (N, H, W), 0, C, dtype=jnp.int32)
    loss = dice_loss(preds, targets)
    jax.block_until_ready(loss)
    ref = dice_loss_ref(preds, targets)
    assert np.allclose(np.asarray(loss), np.asarray(ref),
                       rtol=1e-5, atol=1e-5), f"case1 mismatch: {loss} vs {ref}"

    # Case 2: odd spatial size -> pad (to next 128) + masked last tile.
    N2, C2, H2, W2 = 2, 3, 23, 19
    preds2 = jax.random.normal(k3, (N2, C2, H2, W2), dtype=jnp.float32)
    targets2 = jax.random.randint(k4, (N2, H2, W2), 0, C2, dtype=jnp.int32)
    loss2 = dice_loss(preds2, targets2)
    jax.block_until_ready(loss2)
    ref2 = dice_loss_ref(preds2, targets2)
    assert np.allclose(np.asarray(loss2), np.asarray(ref2),
                       rtol=1e-5, atol=1e-5), f"case2 mismatch: {loss2} vs {ref2}"

    # Case 3: ragged spatial tiling (last tile partially out of bounds,
    # masked in-kernel, no padding) + the C == 2 sigmoid fast path.
    N3, C3, H3, W3 = 1, 2, 48, 48
    preds3 = jax.random.normal(k5, (N3, C3, H3, W3), dtype=jnp.float32)
    targets3 = jax.random.randint(k6, (N3, H3, W3), 0, C3, dtype=jnp.int32)
    loss3 = dice_loss(preds3, targets3, max_rows_per_tile=8)
    jax.block_until_ready(loss3)
    ref3 = dice_loss_ref(preds3, targets3)
    assert np.allclose(np.asarray(loss3), np.asarray(ref3),
                       rtol=1e-5, atol=1e-5), f"case3 mismatch: {loss3} vs {ref3}"

    # Case 4: bf16 logits accepted unchanged (cast inside the kernel).
    preds4 = jax.random.normal(k7, (N, C, H, W), dtype=jnp.bfloat16)
    targets4 = jax.random.randint(k8, (N, H, W), 0, C, dtype=jnp.int32)
    loss4 = dice_loss(preds4, targets4)
    jax.block_until_ready(loss4)
    ref4 = dice_loss_ref(preds4, targets4)
    assert np.allclose(np.asarray(loss4), np.asarray(ref4),
                       rtol=1e-5, atol=1e-5), f"case4 mismatch: {loss4} vs {ref4}"

    print("KERNEL_OK")
</pallas_src>

<mosaic_0001>
module attributes {stable_mosaic.version = 11 : i64} {
  func.func @kernel(%arg0: i32, %arg1: i32, %arg2: memref<1x4x2x128xf32, #tpu.memory_space<vmem>>, %arg3: memref<1x2x128xi32, #tpu.memory_space<vmem>>, %arg4: memref<1x1x3x128xf32, #tpu.memory_space<vmem>>) attributes {dimension_semantics = [#tpu.dimension_semantics<parallel>, #tpu.dimension_semantics<parallel>], iteration_bounds = array<i64: 2, 1>, scalar_prefetch = 0 : i64, scratch_operands = 0 : i64, tpu.core_type = #tpu.core_type<tc>, window_params = [{transform_indices = @transform_0, window_bounds = array<i64: 1, 4, 2, 128>}, {transform_indices = @transform_1, window_bounds = array<i64: 1, 2, 128>}, {transform_indices = @transform_2, window_bounds = array<i64: 1, 1, 3, 128>}]} {
    %c0 = arith.constant 0 : index
    %c1 = arith.constant 1 : index
    %c0_0 = arith.constant 0 : index
    %c0_1 = arith.constant 0 : index
    %0 = vector.load %arg2[%c0, %c1, %c0_0, %c0_1] : memref<1x4x2x128xf32, #tpu.memory_space<vmem>>, vector<1x1x2x128xf32>
    %1 = vector.shape_cast %0 : vector<1x1x2x128xf32> to vector<1x2x128xf32>
    %cst = arith.constant 1.000000e+00 : f32
    %2 = vector.broadcast %cst : f32 to vector<1x2x128xf32>
    %c0_2 = arith.constant 0 : index
    %c0_3 = arith.constant 0 : index
    %c0_4 = arith.constant 0 : index
    %c0_5 = arith.constant 0 : index
    %3 = vector.load %arg2[%c0_2, %c0_3, %c0_4, %c0_5] : memref<1x4x2x128xf32, #tpu.memory_space<vmem>>, vector<1x1x2x128xf32>
    %4 = vector.shape_cast %3 : vector<1x1x2x128xf32> to vector<1x2x128xf32>
    %5 = arith.subf %4, %1 : vector<1x2x128xf32>
    %6 = math.exp %5 : vector<1x2x128xf32>
    %7 = arith.addf %2, %6 : vector<1x2x128xf32>
    %c0_6 = arith.constant 0 : index
    %c2 = arith.constant 2 : index
    %c0_7 = arith.constant 0 : index
    %c0_8 = arith.constant 0 : index
    %8 = vector.load %arg2[%c0_6, %c2, %c0_7, %c0_8] : memref<1x4x2x128xf32, #tpu.memory_space<vmem>>, vector<1x1x2x128xf32>
    %9 = vector.shape_cast %8 : vector<1x1x2x128xf32> to vector<1x2x128xf32>
    %10 = arith.subf %9, %1 : vector<1x2x128xf32>
    %11 = math.exp %10 : vector<1x2x128xf32>
    %12 = arith.addf %7, %11 : vector<1x2x128xf32>
    %c0_9 = arith.constant 0 : index
    %c3 = arith.constant 3 : index
    %c0_10 = arith.constant 0 : index
    %c0_11 = arith.constant 0 : index
    %13 = vector.load %arg2[%c0_9, %c3, %c0_10, %c0_11] : memref<1x4x2x128xf32, #tpu.memory_space<vmem>>, vector<1x1x2x128xf32>
    %14 = vector.shape_cast %13 : vector<1x1x2x128xf32> to vector<1x2x128xf32>
    %15 = arith.subf %14, %1 : vector<1x2x128xf32>
    %16 = math.exp %15 : vector<1x2x128xf32>
    %17 = arith.addf %12, %16 : vector<1x2x128xf32>
    %18 = tpu.reciprocal %17 : vector<1x2x128xf32> -> vector<1x2x128xf32>
    %c0_12 = arith.constant 0 : index
    %c0_13 = arith.constant 0 : index
    %c0_14 = arith.constant 0 : index
    %19 = vector.load %arg3[%c0_12, %c0_13, %c0_14] : memref<1x2x128xi32, #tpu.memory_space<vmem>>, vector<1x2x128xi32>
    %c1_i32 = arith.constant 1 : i32
    %20 = vector.broadcast %c1_i32 : i32 to vector<1x2x128xi32>
    %21 = arith.cmpi eq, %19, %20 : vector<1x2x128xi32>
    %22 = arith.extui %21 : vector<1x2x128xi1> to vector<1x2x128xi32>
    %23 = arith.sitofp %22 : vector<1x2x128xi32> to vector<1x2x128xf32>
    %24 = arith.mulf %18, %23 : vector<1x2x128xf32>
    %cst_15 = arith.constant dense<0.000000e+00> : vector<128xf32>
    %25 = vector.multi_reduction <add>, %24, %cst_15 [0, 1] : vector<1x2x128xf32> to vector<128xf32>
    %c0_16 = arith.constant 0 : index
    %c0_17 = arith.constant 0 : index
    %c0_18 = arith.constant 0 : index
    %c0_19 = arith.constant 0 : index
    %26 = vector.load %arg4[%c0_16, %c0_17, %c0_18, %c0_19] : memref<1x1x3x128xf32, #tpu.memory_space<vmem>>, vector<1x1x1x128xf32>
    %27 = vector.shape_cast %26 : vector<1x1x1x128xf32> to vector<128xf32>
    %28 = vector.shape_cast %25 : vector<128xf32> to vector<1x1x1x128xf32>
    tpu.vector_store %arg4[%c0_16, %c0_17, %c0_18, %c0_19], %28 {strides = array<i32>} : memref<1x1x3x128xf32, #tpu.memory_space<vmem>>, vector<1x1x1x128xf32>,
    %cst_20 = arith.constant dense<0.000000e+00> : vector<128xf32>
    %29 = vector.multi_reduction <add>, %18, %cst_20 [0, 1] : vector<1x2x128xf32> to vector<128xf32>
    %c0_21 = arith.constant 0 : index
    %c0_22 = arith.constant 0 : index
    %c1_23 = arith.constant 1 : index
    %c0_24 = arith.constant 0 : index
    %30 = vector.load %arg4[%c0_21, %c0_22, %c1_23, %c0_24] : memref<1x1x3x128xf32, #tpu.memory_space<vmem>>, vector<1x1x1x128xf32>
    %31 = vector.shape_cast %30 : vector<1x1x1x128xf32> to vector<128xf32>
    %32 = vector.shape_cast %29 : vector<128xf32> to vector<1x1x1x128xf32>
    tpu.vector_store %arg4[%c0_21, %c0_22, %c1_23, %c0_24], %32 {strides = array<i32>} : memref<1x1x3x128xf32, #tpu.memory_space<vmem>>, vector<1x1x1x128xf32>,
    %cst_25 = arith.constant dense<0.000000e+00> : vector<128xf32>
    %33 = vector.multi_reduction <add>, %23, %cst_25 [0, 1] : vector<1x2x128xf32> to vector<128xf32>
    %c0_26 = arith.constant 0 : index
    %c0_27 = arith.constant 0 : index
    %c2_28 = arith.constant 2 : index
    %c0_29 = arith.constant 0 : index
    %34 = vector.load %arg4[%c0_26, %c0_27, %c2_28, %c0_29] : memref<1x1x3x128xf32, #tpu.memory_space<vmem>>, vector<1x1x1x128xf32>
    %35 = vector.shape_cast %34 : vector<1x1x1x128xf32> to vector<128xf32>
    %36 = vector.shape_cast %33 : vector<128xf32> to vector<1x1x1x128xf32>
    tpu.vector_store %arg4[%c0_26, %c0_27, %c2_28, %c0_29], %36 {strides = array<i32>} : memref<1x1x3x128xf32, #tpu.memory_space<vmem>>, vector<1x1x1x128xf32>,
    return
  }
  func.func @transform_0(%arg0: i32, %arg1: i32) -> (i32, i32, i32, i32) {
    %c0_i32 = arith.constant 0 : i32
    %c0_i32_0 = arith.constant 0 : i32
    %c0_i32_1 = arith.constant 0 : i32
    return %arg0, %c0_i32, %arg1, %c0_i32_0 : i32, i32, i32, i32
  }
  func.func @transform_1(%arg0: i32, %arg1: i32) -> (i32, i32, i32) {
    %c0_i32 = arith.constant 0 : i32
    %c0_i32_0 = arith.constant 0 : i32
    return %arg0, %arg1, %c0_i32 : i32, i32, i32
  }
  func.func @transform_2(%arg0: i32, %arg1: i32) -> (i32, i32, i32, i32) {
    %c0_i32 = arith.constant 0 : i32
    %c0_i32_0 = arith.constant 0 : i32
    %c0_i32_1 = arith.constant 0 : i32
    return %arg0, %arg1, %c0_i32, %c0_i32_0 : i32, i32, i32, i32
  }
}

</mosaic_0001>

<llo_original>
// kernel: dice_loss.1
$region0: #{dice_loss.1}
  #allocation0 [shape = 'u32[]', space=smem, size = 0x4, offset = 0x4, fixed_abs, tag = 'smem constant byte address 0x4 - core index']
  #allocation1 [shape = 'u32[72,128]{1,0:T(1,128)}', space=vmem, size = 0x9000, scoped, tag = 'internal scratch']
  %s0 = inlined_call_operand.vmem [shape: f32[2,4,2,128], index: 0, kind: input, shape index: {}]
  %s1 = inlined_call_operand.vmem [shape: s32[2,2,128], index: 1, kind: input, shape index: {}]
  %s2 = inlined_call_operand.vmem [shape: f32[2,1,3,128], index: 2, kind: output, shape index: {}]
  %s3 = sld [smem:[#allocation0]]
  $region41: #{dice_loss.1} parent=0
    _
  %s5 = ssub.s32 1, %s3
  %s6 = scalar_select 0, %s5, %s3
  loop: start=0, step=1, limit=4
  $region2: #{dice_loss.1} parent=0 // loop_pre_header
    _
  $region3: #{dice_loss.1} parent=0 // loop_header
    %s8 = sphi 0, %s12
    %p9 = scmp.ge.s32.totalorder %s8, 4
    %s15 = sphi 0, %s27
    %s16 = sphi 0, %s23
    %s17 = sphi 0, %s15
    %s18 = sphi 0, %s16
    %s19 = sphi 0, %s17
    %s20 = sphi 0, %s18
    %s32 = sphi 0, %s34
    %s35 = sphi 0, %s32
    %s36 = sphi 0, %s35
    %s52 = sphi 0, %s36
    %s60 = sphi 0, %s62
    %s63 = sphi 0, %s60
    %s64 = sphi 0, %s63
    %s80 = sphi 0, %s64
    %s88 = sphi 0, %s90
    %s91 = sphi 0, %s88
    %s92 = sphi 0, %s91
    %s108 = sphi 0, %s92
  $region4: #{dice_loss.1} parent=0 // loop_header_branch
    %11 = sbr.rel (%p9) target = $region8
  $region5: #{dice_loss.1} parent=0 // loop_body
    %s13 = ssub.s32 %s8, 1
    %s14 = ssub.s32 %s8, 2
    %s21 = sadd.s32 1, %s16
    %p22 = scmp.ge.s32.totalorder %s21, 1
    %s23 = scalar_select %p22, 0, %s21
    %s24 = sadd.s32 1, %s15
    %s25 = scalar_select %p22, %s24, %s15
    %p26 = scmp.ge.s32.totalorder %s25, 2
    %s27 = scalar_select %p26, 0, %s25
    %s28 = ssub.s32 %s15, %s27
    %s29 = ssub.s32 %s16, %s23
    %s30 = sor.u32 %s28, %s29
    %p31 = scmp.eq.s32.totalorder %s30, 0
    %s33 = sadd.s32 %s32, 1
    %s34 = scalar_select %p31, %s32, %s33
    %p37 = pneg %p31
    %p38 = scmp.eq.s32.totalorder %s8, 1
    %p39 = por %p37, %p38
    %p40 = scmp.ne.s32.totalorder %s32, %s35
    %p41 = scmp.eq.s32.totalorder %s8, 0
    %p42 = por %p40, %p41
    %p43 = scmp.ne.s32.totalorder %s32, %s35
    %p44 = scmp.eq.s32.totalorder %s13, 1
    %p45 = por %p43, %p44
    %p46 = scmp.ne.s32.totalorder %s35, %s36
    %p47 = scmp.eq.s32.totalorder %s13, 0
    %p48 = por %p46, %p47
    %p49 = scmp.ne.s32.totalorder %s35, %s36
    %p50 = scmp.eq.s32.totalorder %s14, 1
    %p51 = por %p49, %p50
    %p53 = scmp.ne.s32.totalorder %s36, %s52
    %p54 = scmp.eq.s32.totalorder %s14, 0
    %p55 = por %p53, %p54
    %s56 = ssub.s32 %s15, %s27
    %s57 = ssub.s32 %s16, %s23
    %s58 = sor.u32 %s56, %s57
    %p59 = scmp.eq.s32.totalorder %s58, 0
    %s61 = sadd.s32 %s60, 1
    %s62 = scalar_select %p59, %s60, %s61
    %p65 = pneg %p59
    %p66 = scmp.eq.s32.totalorder %s8, 1
    %p67 = por %p65, %p66
    %p68 = scmp.ne.s32.totalorder %s60, %s63
    %p69 = scmp.eq.s32.totalorder %s8, 0
    %p70 = por %p68, %p69
    %p71 = scmp.ne.s32.totalorder %s60, %s63
    %p72 = scmp.eq.s32.totalorder %s13, 1
    %p73 = por %p71, %p72
    %p74 = scmp.ne.s32.totalorder %s63, %s64
    %p75 = scmp.eq.s32.totalorder %s13, 0
    %p76 = por %p74, %p75
    %p77 = scmp.ne.s32.totalorder %s63, %s64
    %p78 = scmp.eq.s32.totalorder %s14, 1
    %p79 = por %p77, %p78
    %p81 = scmp.ne.s32.totalorder %s64, %s80
    %p82 = scmp.eq.s32.totalorder %s14, 0
    %p83 = por %p81, %p82
    %s84 = ssub.s32 %s15, %s27
    %s85 = ssub.s32 %s16, %s23
    %s86 = sor.u32 %s84, %s85
    %p87 = scmp.eq.s32.totalorder %s86, 0
    %s89 = sadd.s32 %s88, 1
    %s90 = scalar_select %p87, %s88, %s89
    %p93 = pneg %p87
    %p94 = scmp.eq.s32.totalorder %s8, 1
    %p95 = por %p93, %p94
    %p96 = scmp.ne.s32.totalorder %s88, %s91
    %p97 = scmp.eq.s32.totalorder %s8, 0
    %p98 = por %p96, %p97
    %p99 = scmp.ne.s32.totalorder %s88, %s91
    %p100 = scmp.eq.s32.totalorder %s13, 1
    %p101 = por %p99, %p100
    %p102 = scmp.ne.s32.totalorder %s91, %s92
    %p103 = scmp.eq.s32.totalorder %s13, 0
    %p104 = por %p102, %p103
    %p105 = scmp.ne.s32.totalorder %s91, %s92
    %p106 = scmp.eq.s32.totalorder %s14, 1
    %p107 = por %p105, %p106
    %p109 = scmp.ne.s32.totalorder %s92, %s108
    %p110 = scmp.eq.s32.totalorder %s14, 0
    %p111 = por %p109, %p110
    %p112 = scmp.le.s32.totalorder 1, %s8
    %p113 = scmp.lt.s32.totalorder %s8, 3
    %p114 = pnand %p112, %p113
    %p115 = pneg %p114
    // Predicated region
    $region9: #{dice_loss.1} parent=5 // pred_check
      _
    $region10: #{dice_loss.1} parent=5 // pred_check_branch
      %117 = sbr.rel (%p114) target = $region12
    $region11: #{dice_loss.1} parent=5 // pred_region
      %s118 = ssub.s32 %s8, 1
    $region12: #{dice_loss.1} parent=5 // pred_fallthru
      _
    %p119 = scmp.lt.s32.totalorder %s8, 2
    // Predicated region
    $region13: #{dice_loss.1} parent=5 // pred_check
      %p120 = pneg %p119
    $region14: #{dice_loss.1} parent=5 // pred_check_branch
      %122 = sbr.rel (%p120) target = $region16
    $region15: #{dice_loss.1} parent=5 // pred_region
      // Predicated region
      $region17: #{dice_loss.1} parent=15 // pred_check
        %p123 = pneg %p42
      $region18: #{dice_loss.1} parent=15 // pred_check_branch
        %125 = sbr.rel (%p123) target = $region20
      $region19: #{dice_loss.1} parent=15 // pred_region
        %p126 = scmp.lt.s32.totalorder %s15, 1
        %s127 = scalar_select %p126, %s15, 1
        %p128 = scmp.lt.s32.totalorder %s16, 0
        %s129 = scalar_select %p128, %s16, 0
        %s130 = smul.addr %s127, 4
        %s131 = sadd.s32 %s129, %s130
        %s132 = smul.addr %s131, 2
        %s133 = scalar_lea.vmem %s0, %s132
      $region20: #{dice_loss.1} parent=15 // pred_fallthru
        _
      // Predicated region
      $region21: #{dice_loss.1} parent=15 // pred_check
        %p134 = pneg %p70
      $region22: #{dice_loss.1} parent=15 // pred_check_branch
        %136 = sbr.rel (%p134) target = $region24
      $region23: #{dice_loss.1} parent=15 // pred_region
        %p137 = scmp.lt.s32.totalorder %s15, 1
        %s138 = scalar_select %p137, %s15, 1
        %p139 = scmp.lt.s32.totalorder %s16, 0
        %s140 = scalar_select %p139, %s16, 0
        %s141 = sadd.s32 %s140, %s138
        %s142 = smul.addr %s141, 2
        %s143 = scalar_lea.vmem %s1, %s142
      $region24: #{dice_loss.1} parent=15 // pred_fallthru
        _
    $region16: #{dice_loss.1} parent=5 // pred_fallthru
      _
    %p144 = scmp.le.s32.totalorder 1, %s8
    %p145 = scmp.lt.s32.totalorder %s8, 3
    %p146 = pnand %p144, %p145
    %p147 = pneg %p146
    // Predicated region
    $region25: #{dice_loss.1} parent=5 // pred_check
      _
    $region26: #{dice_loss.1} parent=5 // pred_check_branch
      %149 = sbr.rel (%p146) target = $region28
    $region27: #{dice_loss.1} parent=5 // pred_region
      %s150 = ssub.s32 %s8, 1
      %p151 = scmp.lt.s32.totalorder %s17, 1
      %s152 = scalar_select %p151, %s17, 1
      %p153 = scmp.lt.s32.totalorder %s18, 0
      %s154 = scalar_select %p153, %s18, 0
      %s155 = smul.addr %s152, 4
      %s156 = sadd.s32 %s154, %s155
      %s157 = smul.addr %s156, 2
      %s158 = scalar_lea.vmem %s0, %s157
      %p159 = pneg %p48
      %p160 = pneg %p45
      %p161 = scmp.lt.s32.totalorder %s17, 1
      %s162 = scalar_select %p161, %s17, 1
      %p163 = scmp.lt.s32.totalorder %s18, 0
      %s164 = scalar_select %p163, %s18, 0
      %s165 = sadd.s32 %s164, %s162
      %s166 = smul.addr %s165, 2
      %s167 = scalar_lea.vmem %s1, %s166
      %p168 = pneg %p76
      %p169 = pneg %p73
      %p170 = pneg %p104
      %p171 = pneg %p101
      %p172 = scmp.lt.s32.totalorder %s17, 1
      %s173 = scalar_select %p172, %s17, 1
      %p174 = scmp.lt.s32.totalorder %s18, 0
      %s175 = scalar_select %p174, %s18, 0
      %s176 = sadd.s32 %s175, %s173
      %s177 = smul.addr %s176, 4
      %s178 = scalar_lea.vmem %s2, %s177
      %p179 = scmp.lt.s32.totalorder %s17, 1
      %s180 = scalar_select %p179, %s17, 1
      %p181 = scmp.lt.s32.totalorder %s18, 0
      %s182 = scalar_select %p181, %s18, 0
      %s183 = smul.addr %s180, 4
      %s184 = sadd.s32 %s182, %s183
      %s185 = smul.addr %s184, 2
      %s186 = scalar_lea.vmem %s0, %s185
      %p187 = scmp.lt.s32.totalorder %s17, 1
      %s188 = scalar_select %p187, %s17, 1
      %p189 = scmp.lt.s32.totalorder %s18, 0
      %s190 = scalar_select %p189, %s18, 0
      %s191 = sadd.s32 %s190, %s188
      %s192 = smul.addr %s191, 2
      %s193 = scalar_lea.vmem %s1, %s192
      %p194 = scmp.lt.s32.totalorder %s17, 1
      %s195 = scalar_select %p194, %s17, 1
      %p196 = scmp.lt.s32.totalorder %s18, 0
      %s197 = scalar_select %p196, %s18, 0
      %s198 = sadd.s32 %s197, %s195
      %s199 = smul.addr %s198, 4
      %s200 = scalar_lea.vmem %s2, %s199
      %s201 = scalar_lea.vmem %s186, 2
      %v202 = vld [vmem:[%s201] sm:$0x3]
      %v203 = vld [vmem:[%s186] sm:$0x3]
      %v204 = vsub.f32 %v203, %v202
      %v205 = vmul.f32 %v204, 1.442695
      %v206 = vpow.pop %v205
      %v207 = vadd.f32 %v206, 1.0
      %s208 = scalar_lea.vmem %s186, 4
      %v209 = vld [vmem:[%s208] sm:$0x3]
      %v210 = vsub.f32 %v209, %v202
      %v211 = vmul.f32 %v210, 1.442695
      %v212 = vpow.pop %v211
      %v213 = vadd.f32 %v207, %v212
      %s214 = scalar_lea.vmem %s186, 6
      %v215 = vld [vmem:[%s214] sm:$0x3]
      %v216 = vsub.f32 %v215, %v202
      %v217 = vmul.f32 %v216, 1.442695
      %v218 = vpow.pop %v217
      %v219 = vadd.f32 %v213, %v218
      %v220 = vrcp.pop %v219
      %v221 = vmul.f32 %v219, %v220
      %v222 = vsub.f32 1.0, %v221
      %v223 = vmul.f32 %v220, %v222
      %v224 = vadd.f32 %v220, %v223
      %vm225 = vweird.f32 %v219
      %vm226 = vweird.f32 %v220
      %vm227 = vmor %vm225, %vm226
      %v228 = vsel %vm227, %v220, %v224
      %v229 = vand.u32 2147483647, %v219
      %vm230 = vcmp.eq.f32.partialorder %v229, 8.507059e+37
      %v231 = vand.u32 %v219, 2147483648
      %v232 = vor.u32 1.1754944e-38, %v231
      %v233 = vsel %vm230, %v232, %v228
      %v234 = vld [vmem:[%s193] sm:$0x3]
      %vm235 = vcmp.eq.s32.totalorder %v234, 1
      %v236 = vsel %vm235, 1, 0
      %v237 = vcvt.s32.f32 %v236
      %v238 = vmul.f32 %v233, %v237
      %vm239 = vcmask 1041408
      %v240 = vsel %vm239, %v238, 0.0
      %v241 = vrot.slane %v240, 4
      %v242 = vadd.f32 %v240, %v241
      %v243 = vrot.slane %v242, 2
      %v244 = vadd.f32 %v242, %v243
      %v245 = vrot.slane %v244, 1
      %v246 = vadd.f32 %v244, %v245
      %247 = vst [vmem:[%s200] sm:$0x1] %v246
      %v248 = vsel %vm239, %v233, 0.0
      %v249 = vrot.slane %v248, 4
      %v250 = vadd.f32 %v248, %v249
      %v251 = vrot.slane %v250, 2
      %v252 = vadd.f32 %v250, %v251
      %v253 = vrot.slane %v252, 1
      %v254 = vadd.f32 %v252, %v253
      %255 = vst [vmem:[%s200 + $0x1] sm:$0x1] %v254
      %v256 = vsel %vm239, %v237, 0.0
      %v257 = vrot.slane %v256, 4
      %v258 = vadd.f32 %v256, %v257
      %v259 = vrot.slane %v258, 2
      %v260 = vadd.f32 %v258, %v259
      %v261 = vrot.slane %v260, 1
      %v262 = vadd.f32 %v260, %v261
      %263 = vst [vmem:[%s200 + $0x2] sm:$0x1] %v262
      %p264 = scmp.lt.s32.totalorder %s17, 1
      %s265 = scalar_select %p264, %s17, 1
      %p266 = scmp.lt.s32.totalorder %s18, 0
      %s267 = scalar_select %p266, %s18, 0
      %s268 = sadd.s32 %s267, %s265
      %s269 = smul.addr %s268, 4
      %s270 = scalar_lea.vmem %s2, %s269
      // Predicated region
      $region29: #{dice_loss.1} parent=27 // pred_check
        %p271 = pneg %p101
      $region30: #{dice_loss.1} parent=27 // pred_check_branch
        %273 = sbr.rel (%p271) target = $region32
      $region31: #{dice_loss.1} parent=27 // pred_region
        _
      $region32: #{dice_loss.1} parent=27 // pred_fallthru
        _
    $region28: #{dice_loss.1} parent=5 // pred_fallthru
      _
    %p274 = scmp.le.s32.totalorder 2, %s8
    // Predicated region
    $region33: #{dice_loss.1} parent=5 // pred_check
      %p275 = pneg %p274
    $region34: #{dice_loss.1} parent=5 // pred_check_branch
      %277 = sbr.rel (%p275) target = $region36
    $region35: #{dice_loss.1} parent=5 // pred_region
      %s278 = ssub.s32 %s8, 2
      // Predicated region
      $region37: #{dice_loss.1} parent=35 // pred_check
        %p279 = pneg %p107
      $region38: #{dice_loss.1} parent=35 // pred_check_branch
        %281 = sbr.rel (%p279) target = $region40
      $region39: #{dice_loss.1} parent=35 // pred_region
        %p282 = scmp.lt.s32.totalorder %s19, 1
        %s283 = scalar_select %p282, %s19, 1
        %p284 = scmp.lt.s32.totalorder %s20, 0
        %s285 = scalar_select %p284, %s20, 0
        %s286 = sadd.s32 %s285, %s283
        %s287 = smul.addr %s286, 4
        %s288 = scalar_lea.vmem %s2, %s287
      $region40: #{dice_loss.1} parent=35 // pred_fallthru
        _
    $region36: #{dice_loss.1} parent=5 // pred_fallthru
      _
  $region6: #{dice_loss.1} parent=0 // loop_footer
    %s12 = sadd.s32 1, %s8
  $region7: #{dice_loss.1} parent=0 // loop_footer_branch
    %7 = sbr.rel target = $region3
  $region8: #{dice_loss.1} parent=0 // loop_exit
    _

</llo_original>
